<compile_context>
chip_gen: v6e
topology: v6e:2x2x1
jax: 0.10.0
libtpu: 0.0.40
codegen_flags: <defaults>
</compile_context>

<pallas_src>
import jax
import jax.numpy as jnp
from jax.experimental import pallas as pl
from jax.experimental.pallas import tpu as pltpu


def _round_down(x, m):
    return (x // m) * m


def dice_loss_pallas(pred, target, weights, *, tile=65536, acc_width=8192):
    """Weighted soft-Dice loss matching the PyTorch Dice_Loss.forward."""
    n, c, d, h, w = pred.shape
    s = d * h * w

    # Native-layout flatten (contiguous reshape; no transpose, no pad).
    p3 = pred.reshape(n, c, s)
    t3 = target.reshape(n, c, s)

    # Lane tile: multiple of 128, or the full spatial extent when S < 128.
    tile_r = max(128, _round_down(int(tile), 128))
    if s >= 128:
        s_tile = min(tile_r, _round_down(s, 128))
    else:
        s_tile = s  # full-extent last dim is always a legal block

    # Fold batch elements into one block when a single-n block is small.
    nb = 1
    if n > 1 and 2 * s_tile <= tile_r:
        max_fold = max(1, tile_r // s_tile)
        for cand in range(min(n, max_fold), 1, -1):
            if n % cand == 0:
                nb = cand
                break

    num_groups = n // nb
    num_s = pl.cdiv(s, s_tile)
    needs_mask = (s % s_tile) != 0

    # Narrow accumulators, decoupled from the input tile width.
    acc_w = min(s_tile, max(128, _round_down(int(acc_width), 128)))
    n_chunks = -(-s_tile // acc_w)

    def kernel(p_ref, t_ref, inter_ref, union_ref, inter_acc, union_acc):
        s_i = pl.program_id(1)

        @pl.when(s_i == 0)
        def _():
            inter_acc[...] = jnp.zeros_like(inter_acc)
            union_acc[...] = jnp.zeros_like(union_acc)

        p = p_ref[...].astype(jnp.float32)   # (nb, C, s_tile)
        t = t_ref[...].astype(jnp.float32)

        lane_base = s_i * s_tile
        for j in range(n_chunks):            # static, short chunk loop
            off = j * acc_w
            w_j = min(acc_w, s_tile - off)
            pc = p[:, :, off:off + w_j]
            tc = t[:, :, off:off + w_j]
            prod = pc * tc
            summ = pc + tc
            if needs_mask:
                idx = lane_base + off + jax.lax.broadcasted_iota(
                    jnp.int32, (nb, c, w_j), 2)
                valid = idx < s
                prod = jnp.where(valid, prod, 0.0)
                summ = jnp.where(valid, summ, 0.0)
            inter_acc[:, :w_j] += jnp.sum(prod, axis=0)
            union_acc[:, :w_j] += jnp.sum(summ, axis=0)

        @pl.when(s_i == pl.num_programs(1) - 1)
        def _():
            inter_ref[...] = jnp.sum(inter_acc[...], axis=-1, keepdims=True)
            union_ref[...] = jnp.sum(union_acc[...], axis=-1, keepdims=True)

    itemsize = jnp.dtype(pred.dtype).itemsize
    inter_parts, union_parts = pl.pallas_call(
        kernel,
        out_shape=(
            jax.ShapeDtypeStruct((num_groups, c, 1), jnp.float32),
            jax.ShapeDtypeStruct((num_groups, c, 1), jnp.float32),
        ),
        grid_spec=pltpu.PrefetchScalarGridSpec(
            num_scalar_prefetch=0,
            grid=(num_groups, num_s),
            in_specs=[
                pl.BlockSpec((nb, c, s_tile), lambda gi, si: (gi, 0, si)),
                pl.BlockSpec((nb, c, s_tile), lambda gi, si: (gi, 0, si)),
            ],
            out_specs=[
                pl.BlockSpec((None, c, 1), lambda gi, si: (gi, 0, 0)),
                pl.BlockSpec((None, c, 1), lambda gi, si: (gi, 0, 0)),
            ],
            scratch_shapes=[
                pltpu.VMEM((c, acc_w), jnp.float32),   # intersection partials
                pltpu.VMEM((c, acc_w), jnp.float32),   # union partials
            ],
        ),
        compiler_params=pltpu.CompilerParams(
            dimension_semantics=("parallel", "arbitrary"),
            vmem_limit_bytes=32 * 1024 * 1024,
        ),
        cost_estimate=pl.CostEstimate(
            flops=3 * n * c * s,
            transcendentals=0,
            bytes_accessed=2 * n * c * s * itemsize,
        ),
    )(p3, t3)

    # O(C) weighted dice epilogue in plain JAX (cheap; lets the grid's batch
    # axis stay "parallel" for v7x megacore).
    smooth = jnp.float32(1.0)
    inter_tot = jnp.sum(inter_parts[:, :, 0], axis=0)   # (C,)
    union_tot = jnp.sum(union_parts[:, :, 0], axis=0)   # (C,)
    w_vec = jnp.asarray(weights, dtype=jnp.float32).reshape(-1)
    per_class = 1.0 - (2.0 * inter_tot + smooth) / (union_tot + smooth)
    return jnp.sum(w_vec * per_class)


def dice_loss_ref(pred, target, weights):
    smooth = 1.0
    loss = 0.0
    num_classes = pred.shape[1]
    for i in range(num_classes):
        inter = jnp.sum(pred[:, i] * target[:, i])
        union = jnp.sum(pred[:, i] + target[:, i])
        loss = loss + weights[i] * (1.0 - (2.0 * inter + smooth) / (union + smooth))
    return loss


if __name__ == "__main__":
    # Default module config: 6 classes, each weighted 1/6.
    weights = [1.0 / 6.0] * 6

    key = jax.random.PRNGKey(0)
    k1, k2 = jax.random.split(key)
    # (N, C, D, H, W) — C must match len(weights)
    shape = (2, 6, 4, 8, 8)
    pred = jax.nn.softmax(jax.random.normal(k1, shape, dtype=jnp.float32), axis=1)
    target = (jax.random.uniform(k2, shape, dtype=jnp.float32) > 0.5).astype(jnp.float32)

    loss = jax.block_until_ready(dice_loss_pallas(pred, target, weights))
    ref = jax.block_until_ready(dice_loss_ref(pred, target, weights))

    assert jnp.allclose(loss, ref, rtol=1e-5, atol=1e-5), (loss, ref)
    print("KERNEL_OK")
</pallas_src>

<mosaic_0001>
module attributes {stable_mosaic.version = 11 : i64} {
  func.func @kernel(%arg0: i32, %arg1: i32, %arg2: memref<2x6x256xf32, #tpu.memory_space<vmem>>, %arg3: memref<2x6x256xf32, #tpu.memory_space<vmem>>, %arg4: memref<1x6x1xf32, #tpu.memory_space<vmem>>, %arg5: memref<1x6x1xf32, #tpu.memory_space<vmem>>, %arg6: memref<6x256xf32, #tpu.memory_space<vmem>>, %arg7: memref<6x256xf32, #tpu.memory_space<vmem>>) attributes {dimension_semantics = [#tpu.dimension_semantics<parallel>, #tpu.dimension_semantics<arbitrary>], iteration_bounds = array<i64: 1, 1>, scalar_prefetch = 0 : i64, scratch_operands = 2 : i64, tpu.core_type = #tpu.core_type<tc>, window_params = [{transform_indices = @transform_0, window_bounds = array<i64: 2, 6, 256>}, {transform_indices = @transform_1, window_bounds = array<i64: 2, 6, 256>}, {transform_indices = @transform_2, window_bounds = array<i64: 1, 6, 1>}, {transform_indices = @transform_3, window_bounds = array<i64: 1, 6, 1>}]} {
    %c0_i32 = arith.constant 0 : i32
    %0 = arith.cmpi eq, %arg1, %c0_i32 : i32
    %1 = arith.extui %0 : i1 to i32
    %c0_i32_0 = arith.constant 0 : i32
    %2 = arith.cmpi ne, %1, %c0_i32_0 : i32
    scf.if %2 {
      %cst_17 = arith.constant 0.000000e+00 : f32
      %18 = vector.broadcast %cst_17 : f32 to vector<6x256xf32>
      %c0_18 = arith.constant 0 : index
      %c0_19 = arith.constant 0 : index
      %19 = vector.load %arg6[%c0_18, %c0_19] : memref<6x256xf32, #tpu.memory_space<vmem>>, vector<6x256xf32>
      tpu.vector_store %arg6[%c0_18, %c0_19], %18 {strides = array<i32>} : memref<6x256xf32, #tpu.memory_space<vmem>>, vector<6x256xf32>,
      %cst_20 = arith.constant 0.000000e+00 : f32
      %20 = vector.broadcast %cst_20 : f32 to vector<6x256xf32>
      %c0_21 = arith.constant 0 : index
      %c0_22 = arith.constant 0 : index
      %21 = vector.load %arg7[%c0_21, %c0_22] : memref<6x256xf32, #tpu.memory_space<vmem>>, vector<6x256xf32>
      tpu.vector_store %arg7[%c0_21, %c0_22], %20 {strides = array<i32>} : memref<6x256xf32, #tpu.memory_space<vmem>>, vector<6x256xf32>,
    } else {
    }
    %c0 = arith.constant 0 : index
    %c0_1 = arith.constant 0 : index
    %c0_2 = arith.constant 0 : index
    %3 = vector.load %arg2[%c0, %c0_1, %c0_2] : memref<2x6x256xf32, #tpu.memory_space<vmem>>, vector<2x6x256xf32>
    %c0_3 = arith.constant 0 : index
    %c0_4 = arith.constant 0 : index
    %c0_5 = arith.constant 0 : index
    %4 = vector.load %arg3[%c0_3, %c0_4, %c0_5] : memref<2x6x256xf32, #tpu.memory_space<vmem>>, vector<2x6x256xf32>
    %5 = arith.mulf %3, %4 : vector<2x6x256xf32>
    %6 = arith.addf %3, %4 : vector<2x6x256xf32>
    %c0_6 = arith.constant 0 : index
    %c0_7 = arith.constant 0 : index
    %7 = vector.load %arg6[%c0_6, %c0_7] : memref<6x256xf32, #tpu.memory_space<vmem>>, vector<6x256xf32>
    %cst = arith.constant dense<0.000000e+00> : vector<6x256xf32>
    %8 = vector.multi_reduction <add>, %5, %cst [0] : vector<2x6x256xf32> to vector<6x256xf32>
    %9 = arith.addf %7, %8 : vector<6x256xf32>
    %c0_8 = arith.constant 0 : index
    %c0_9 = arith.constant 0 : index
    %10 = vector.load %arg6[%c0_8, %c0_9] : memref<6x256xf32, #tpu.memory_space<vmem>>, vector<6x256xf32>
    tpu.vector_store %arg6[%c0_8, %c0_9], %9 {strides = array<i32>} : memref<6x256xf32, #tpu.memory_space<vmem>>, vector<6x256xf32>,
    %c0_10 = arith.constant 0 : index
    %c0_11 = arith.constant 0 : index
    %11 = vector.load %arg7[%c0_10, %c0_11] : memref<6x256xf32, #tpu.memory_space<vmem>>, vector<6x256xf32>
    %cst_12 = arith.constant dense<0.000000e+00> : vector<6x256xf32>
    %12 = vector.multi_reduction <add>, %6, %cst_12 [0] : vector<2x6x256xf32> to vector<6x256xf32>
    %13 = arith.addf %11, %12 : vector<6x256xf32>
    %c0_13 = arith.constant 0 : index
    %c0_14 = arith.constant 0 : index
    %14 = vector.load %arg7[%c0_13, %c0_14] : memref<6x256xf32, #tpu.memory_space<vmem>>, vector<6x256xf32>
    tpu.vector_store %arg7[%c0_13, %c0_14], %13 {strides = array<i32>} : memref<6x256xf32, #tpu.memory_space<vmem>>, vector<6x256xf32>,
    %c0_i32_15 = arith.constant 0 : i32
    %15 = arith.cmpi eq, %arg1, %c0_i32_15 : i32
    %16 = arith.extui %15 : i1 to i32
    %c0_i32_16 = arith.constant 0 : i32
    %17 = arith.cmpi ne, %16, %c0_i32_16 : i32
    scf.if %17 {
      %c0_17 = arith.constant 0 : index
      %c0_18 = arith.constant 0 : index
      %18 = vector.load %arg6[%c0_17, %c0_18] : memref<6x256xf32, #tpu.memory_space<vmem>>, vector<6x256xf32>
      %cst_19 = arith.constant dense<0.000000e+00> : vector<6xf32>
      %19 = vector.multi_reduction <add>, %18, %cst_19 [1] : vector<6x256xf32> to vector<6xf32>
      %20 = vector.shape_cast %19 : vector<6xf32> to vector<6x1xf32>
      %c0_20 = arith.constant 0 : index
      %c0_21 = arith.constant 0 : index
      %c0_22 = arith.constant 0 : index
      %21 = vector.load %arg4[%c0_20, %c0_21, %c0_22] : memref<1x6x1xf32, #tpu.memory_space<vmem>>, vector<1x6x1xf32>
      %22 = vector.shape_cast %21 : vector<1x6x1xf32> to vector<6x1xf32>
      %23 = vector.shape_cast %20 : vector<6x1xf32> to vector<1x6x1xf32>
      tpu.vector_store %arg4[%c0_20, %c0_21, %c0_22], %23 {strides = array<i32>} : memref<1x6x1xf32, #tpu.memory_space<vmem>>, vector<1x6x1xf32>,
      %c0_23 = arith.constant 0 : index
      %c0_24 = arith.constant 0 : index
      %24 = vector.load %arg7[%c0_23, %c0_24] : memref<6x256xf32, #tpu.memory_space<vmem>>, vector<6x256xf32>
      %cst_25 = arith.constant dense<0.000000e+00> : vector<6xf32>
      %25 = vector.multi_reduction <add>, %24, %cst_25 [1] : vector<6x256xf32> to vector<6xf32>
      %26 = vector.shape_cast %25 : vector<6xf32> to vector<6x1xf32>
      %c0_26 = arith.constant 0 : index
      %c0_27 = arith.constant 0 : index
      %c0_28 = arith.constant 0 : index
      %27 = vector.load %arg5[%c0_26, %c0_27, %c0_28] : memref<1x6x1xf32, #tpu.memory_space<vmem>>, vector<1x6x1xf32>
      %28 = vector.shape_cast %27 : vector<1x6x1xf32> to vector<6x1xf32>
      %29 = vector.shape_cast %26 : vector<6x1xf32> to vector<1x6x1xf32>
      tpu.vector_store %arg5[%c0_26, %c0_27, %c0_28], %29 {strides = array<i32>} : memref<1x6x1xf32, #tpu.memory_space<vmem>>, vector<1x6x1xf32>,
    } else {
    }
    return
  }
  func.func @transform_0(%arg0: i32, %arg1: i32) -> (i32, i32, i32) {
    %c0_i32 = arith.constant 0 : i32
    %c0_i32_0 = arith.constant 0 : i32
    return %arg0, %c0_i32, %arg1 : i32, i32, i32
  }
  func.func @transform_1(%arg0: i32, %arg1: i32) -> (i32, i32, i32) {
    %c0_i32 = arith.constant 0 : i32
    %c0_i32_0 = arith.constant 0 : i32
    return %arg0, %c0_i32, %arg1 : i32, i32, i32
  }
  func.func @transform_2(%arg0: i32, %arg1: i32) -> (i32, i32, i32) {
    %c0_i32 = arith.constant 0 : i32
    %c0_i32_0 = arith.constant 0 : i32
    %c0_i32_1 = arith.constant 0 : i32
    return %arg0, %c0_i32, %c0_i32_0 : i32, i32, i32
  }
  func.func @transform_3(%arg0: i32, %arg1: i32) -> (i32, i32, i32) {
    %c0_i32 = arith.constant 0 : i32
    %c0_i32_0 = arith.constant 0 : i32
    %c0_i32_1 = arith.constant 0 : i32
    return %arg0, %c0_i32, %c0_i32_0 : i32, i32, i32
  }
}

</mosaic_0001>

<llo_original>
// kernel: tpu_custom_call.1
$region0: #{tpu_custom_call.1}
  #allocation0 [shape = 'u32[]', space=smem, size = 0x4, offset = 0x4, fixed_abs, tag = 'smem constant byte address 0x4 - core index']
  #allocation1 [shape = 'u32[144,128]{1,0:T(1,128)}', space=vmem, size = 0x12000, scoped, tag = 'internal scratch']
  #allocation2 [shape = 'f32[6,256]{1,0:T(8,128)}', space=vmem, size = 0x2000, scoped, tag = 'scratch operand']
  #allocation3 [shape = 'f32[6,256]{1,0:T(8,128)}', space=vmem, size = 0x2000, scoped, tag = 'scratch operand']
  %s0 = inlined_call_operand.vmem [shape: f32[2,6,256], index: 0, kind: input, shape index: {}]
  %s1 = inlined_call_operand.vmem [shape: f32[2,6,256], index: 1, kind: input, shape index: {}]
  %s2 = inlined_call_operand.vmem [shape: f32[1,6,1], index: 2, kind: output, shape index: {0}]
  %s3 = inlined_call_operand.vmem [shape: f32[1,6,1], index: 3, kind: output, shape index: {1}]
  %4 = xla_tuple %s2, %s3
  %s5 = sld [smem:[#allocation0]]
  $region34: #{tpu_custom_call.1} parent=0
    _
  %s7 = ssub.s32 1, %s5
  %s8 = scalar_select 0, %s7, %s5
  // Predicated region
  $region2: #{tpu_custom_call.1} parent=0 // pred_check
    _
  $region3: #{tpu_custom_call.1} parent=0 // pred_check_branch
    %10 = sbr.rel (0) target = $region5
  $region4: #{tpu_custom_call.1} parent=0 // pred_region
    _
  $region5: #{tpu_custom_call.1} parent=0 // pred_fallthru
    _
  // Predicated region
  $region6: #{tpu_custom_call.1} parent=0 // pred_check
    _
  $region7: #{tpu_custom_call.1} parent=0 // pred_check_branch
    %12 = sbr.rel (0) target = $region9
  $region8: #{tpu_custom_call.1} parent=0 // pred_region
    _
  $region9: #{tpu_custom_call.1} parent=0 // pred_fallthru
    _
  %p13 = scmp.eq.s32.totalorder 0, 0
  // Predicated region
  $region10: #{tpu_custom_call.1} parent=0 // pred_check
    %p14 = pneg %p13
  $region11: #{tpu_custom_call.1} parent=0 // pred_check_branch
    %16 = sbr.rel (%p14) target = $region13
  $region12: #{tpu_custom_call.1} parent=0 // pred_region
    %17 = vst [vmem:[#allocation2] sm:$0x3f] 0.0
    %18 = vst [vmem:[#allocation2 + $0x8] sm:$0x3f] 0.0
    %19 = vst [vmem:[#allocation3] sm:$0x3f] 0.0
    %20 = vst [vmem:[#allocation3 + $0x8] sm:$0x3f] 0.0
  $region13: #{tpu_custom_call.1} parent=0 // pred_fallthru
    _
  %v21 = vld [vmem:[%s0] sm:$0x3f]
  %v22 = vld [vmem:[%s0 + $0x8] sm:$0x3f]
  %v23 = vld [vmem:[%s0 + $0x10] sm:$0x3f]
  %v24 = vld [vmem:[%s0 + $0x18] sm:$0x3f]
  %v25 = vld [vmem:[%s1] sm:$0x3f]
  %v26 = vld [vmem:[%s1 + $0x8] sm:$0x3f]
  %v27 = vld [vmem:[%s1 + $0x10] sm:$0x3f]
  %v28 = vld [vmem:[%s1 + $0x18] sm:$0x3f]
  %v29 = vmul.f32 %v21, %v25
  %v30 = vmul.f32 %v22, %v26
  %v31 = vmul.f32 %v23, %v27
  %v32 = vmul.f32 %v24, %v28
  %v33 = vadd.f32 %v21, %v25
  %v34 = vadd.f32 %v22, %v26
  %v35 = vadd.f32 %v23, %v27
  %v36 = vadd.f32 %v24, %v28
  %v37 = vld [vmem:[#allocation2] sm:$0x3f]
  %v38 = vld [vmem:[#allocation2 + $0x8] sm:$0x3f]
  %vm39 = vcmask 1045504
  %v40 = vsel %vm39, %v29, 0.0
  %v41 = vsel %vm39, %v31, 0.0
  %v42 = vadd.f32 %v40, %v41
  %v43 = vsel %vm39, %v30, 0.0
  %v44 = vsel %vm39, %v32, 0.0
  %v45 = vadd.f32 %v43, %v44
  %v46 = vadd.f32 %v37, %v42
  %v47 = vadd.f32 %v38, %v45
  %48 = vst [vmem:[#allocation2] sm:$0x3f] %v46
  %49 = vst [vmem:[#allocation2 + $0x8] sm:$0x3f] %v47
  %v50 = vld [vmem:[#allocation3] sm:$0x3f]
  %v51 = vld [vmem:[#allocation3 + $0x8] sm:$0x3f]
  %v52 = vsel %vm39, %v33, 0.0
  %v53 = vsel %vm39, %v35, 0.0
  %v54 = vadd.f32 %v52, %v53
  %v55 = vsel %vm39, %v34, 0.0
  %v56 = vsel %vm39, %v36, 0.0
  %v57 = vadd.f32 %v55, %v56
  %v58 = vadd.f32 %v50, %v54
  %v59 = vadd.f32 %v51, %v57
  %60 = vst [vmem:[#allocation3] sm:$0x3f] %v58
  %61 = vst [vmem:[#allocation3 + $0x8] sm:$0x3f] %v59
  // Predicated region
  $region14: #{tpu_custom_call.1} parent=0 // pred_check
    %p62 = pneg %p13
  $region15: #{tpu_custom_call.1} parent=0 // pred_check_branch
    %64 = sbr.rel (%p62) target = $region17
  $region16: #{tpu_custom_call.1} parent=0 // pred_region
    %v65 = vld [vmem:[#allocation2] sm:$0x3f]
    %v66 = vld [vmem:[#allocation2 + $0x8] sm:$0x3f]
    %v67 = vsel %vm39, %v65, 0.0
    %v68 = vsel %vm39, %v66, 0.0
    %v69 = vadd.f32 %v67, %v68
    %70 = vadd.xlane.f32.xlu0 %v69
    %v71 = vpop.xlane.xlu0 %70
    %vm72 = vcmask 5120
    %73 = vst.msk [vmem:[%s2] sm:$0x3f] %vm72, %v71
    %v74 = vld [vmem:[#allocation3] sm:$0x3f]
    %v75 = vld [vmem:[#allocation3 + $0x8] sm:$0x3f]
    %v76 = vsel %vm39, %v74, 0.0
    %v77 = vsel %vm39, %v75, 0.0
    %v78 = vadd.f32 %v76, %v77
    %79 = vadd.xlane.f32.xlu0 %v78
    %v80 = vpop.xlane.xlu0 %79
    %81 = vst.msk [vmem:[%s3] sm:$0x3f] %vm72, %v80
  $region17: #{tpu_custom_call.1} parent=0 // pred_fallthru
    _
  // Predicated region
  $region18: #{tpu_custom_call.1} parent=0 // pred_check
    _
  $region19: #{tpu_custom_call.1} parent=0 // pred_check_branch
    %83 = sbr.rel (0) target = $region21
  $region20: #{tpu_custom_call.1} parent=0 // pred_region
    _
  $region21: #{tpu_custom_call.1} parent=0 // pred_fallthru
    _
  // Predicated region
  $region22: #{tpu_custom_call.1} parent=0 // pred_check
    _
  $region23: #{tpu_custom_call.1} parent=0 // pred_check_branch
    %85 = sbr.rel (0) target = $region25
  $region24: #{tpu_custom_call.1} parent=0 // pred_region
    _
  $region25: #{tpu_custom_call.1} parent=0 // pred_fallthru
    _
  // Predicated region
  $region26: #{tpu_custom_call.1} parent=0 // pred_check
    _
  $region27: #{tpu_custom_call.1} parent=0 // pred_check_branch
    %87 = sbr.rel (0) target = $region29
  $region28: #{tpu_custom_call.1} parent=0 // pred_region
    _
  $region29: #{tpu_custom_call.1} parent=0 // pred_fallthru
    _
  // Predicated region
  $region30: #{tpu_custom_call.1} parent=0 // pred_check
    _
  $region31: #{tpu_custom_call.1} parent=0 // pred_check_branch
    %89 = sbr.rel (0) target = $region33
  $region32: #{tpu_custom_call.1} parent=0 // pred_region
    _
  $region33: #{tpu_custom_call.1} parent=0 // pred_fallthru
    _

</llo_original>
